<compile_context>
chip_gen: v5e
topology: v5e:2x2
jax: 0.10.0
libtpu: 0.0.40
codegen_flags: <defaults>
</compile_context>

<pallas_src>
import jax
import jax.numpy as jnp
from jax import lax
from jax.experimental import pallas as pl
from jax.experimental.pallas import tpu as pltpu

EPS = 1e-8
_LANE = 128
_CHUNK_TARGET_BYTES = 4 * 1024 * 1024   # two-pass chunk size (per buffer)


def _round_up(a: int, b: int) -> int:
    return (a + b - 1) // b * b


def _cdiv(a: int, b: int) -> int:
    return (a + b - 1) // b


def _vmem_capacity_bytes() -> int:
    """Physical VMEM of the local TPU (128 MiB v5e/v6e, 64 MiB v7x)."""
    try:
        info = pltpu.get_tpu_info()
        cap = getattr(info, "vmem_capacity_bytes", None)
        if cap:
            return int(cap)
    except Exception:
        pass
    return 64 * 1024 * 1024   # conservative (v7x-sized) fallback


def _choose_layout(e: int):
    """Copy-free lane-dense layout (rows, lanes) for a flattened image, or None."""
    # Prefer fully (8,128)-dense slabs.
    for lane in (1024, 512, 256, 128):
        if e % (8 * lane) == 0:
            return e // lane, lane
    # Next best: lane-aligned last dim; row dim equals the full array dim.
    for lane in (1024, 512, 256, 128):
        if e % lane == 0:
            return e // lane, lane
    return None   # fall back to the natural NCHW block (no copies, masked lanes)


# ---------------------------------------------------------------------------
# Path A: whole image(s) per grid step (single pass over HBM: read + write).
# ---------------------------------------------------------------------------
def _single_pass_kernel(x_ref, o_ref):
    x = x_ref[...]
    xf = x.astype(jnp.float32)
    mn = xf
    mx = xf
    for ax in range(xf.ndim - 1, 0, -1):      # per-image reduction (keep batch axis)
        mn = jnp.min(mn, axis=ax, keepdims=True)
        mx = jnp.max(mx, axis=ax, keepdims=True)
    inv = 1.0 / (mx - mn + EPS)               # exact; one scalar per image
    o_ref[...] = ((xf - mn) * inv).astype(o_ref.dtype)


def _normalize_single_pass(x, n, e, out_dtype, vmem_budget, vmem_limit):
    layout = _choose_layout(e)
    if layout is None:
        xb = x                                    # natural shape; trailing dims are full
        tail = x.shape[1:]
    else:
        r, lane = layout
        xb = x.reshape((n, r, lane))              # copy-free reshape
        tail = (r, lane)
    nz = len(tail)

    in_item = jnp.dtype(x.dtype).itemsize
    out_item = jnp.dtype(out_dtype).itemsize
    f32_tmp = 0 if jnp.dtype(x.dtype) == jnp.dtype(jnp.float32) else 4
    # True residency: double-buffered input + output, plus the f32 working copy.
    per_image = e * (2 * (in_item + out_item) + f32_tmp)
    max_imgs = max(1, vmem_budget // per_image)

    # Keep the grid >= 2 (ideally 4) steps so the pipeline overlaps DMA/compute
    # and v7x can shard the parallel axis across both TensorCores.
    target_steps = min(n, 4)
    b_tile = int(max(1, min(max_imgs, n // target_steps)))
    grid = (_cdiv(n, b_tile),)

    idx = lambda i: (i,) + (0,) * nz
    out = pl.pallas_call(
        _single_pass_kernel,
        out_shape=jax.ShapeDtypeStruct(xb.shape, out_dtype),
        grid_spec=pltpu.PrefetchScalarGridSpec(
            num_scalar_prefetch=0,
            grid=grid,
            in_specs=[pl.BlockSpec((b_tile,) + tail, idx)],
            out_specs=pl.BlockSpec((b_tile,) + tail, idx),
        ),
        compiler_params=pltpu.CompilerParams(
            dimension_semantics=("parallel",),
            vmem_limit_bytes=vmem_limit,
        ),
    )(xb)
    return out.reshape(x.shape)


# ---------------------------------------------------------------------------
# Path B: two-pass tiled version for images that do not fit in VMEM.
# ---------------------------------------------------------------------------
def _make_minmax_kernel(r_tot, r_chunk, chunks_per_split, n_split):
    def kernel(x_ref, mn_ref, mx_ref, mn_sc, mx_sc):
        i = pl.program_id(0)
        k = pl.program_id(1)

        @pl.when(k == 0)
        def _():
            mn_sc[...] = jnp.full_like(mn_sc, jnp.inf)
            mx_sc[...] = jnp.full_like(mx_sc, -jnp.inf)

        # Global chunk index -> row offset; mask the ragged final chunk so that
        # garbage rows from the partial edge block cannot corrupt min/max.
        gk = (i % n_split) * chunks_per_split + k
        valid = r_tot - gk * r_chunk
        x = x_ref[...].astype(jnp.float32)                     # (1, r_chunk, 128)
        rows = lax.broadcasted_iota(jnp.int32, x.shape, 1)
        in_b = rows < valid
        mn_sc[...] = jnp.minimum(mn_sc[...], jnp.min(jnp.where(in_b, x, jnp.inf)))
        mx_sc[...] = jnp.maximum(mx_sc[...], jnp.max(jnp.where(in_b, x, -jnp.inf)))

        @pl.when(k == pl.num_programs(1) - 1)
        def _():
            mn_ref[...] = mn_sc[...]
            mx_ref[...] = mx_sc[...]

    return kernel


def _rescale_kernel(mn_ref, inv_ref, x_ref, o_ref):
    # mn_ref / inv_ref: scalar-prefetch SMEM refs of shape (n,), read per image.
    i = pl.program_id(0)
    mn = mn_ref[i]
    inv = inv_ref[i]
    o_ref[...] = ((x_ref[...].astype(jnp.float32) - mn) * inv).astype(o_ref.dtype)


def _normalize_two_pass(x, n, e, out_dtype, vmem_limit):
    in_item = jnp.dtype(x.dtype).itemsize
    out_item = jnp.dtype(out_dtype).itemsize

    x2 = x.reshape((n, e))
    e_pad = _round_up(e, _LANE)
    if e_pad != e:
        # TODO(synk): this pad (and the matching slice below) costs an extra HBM
        # round-trip; only hit when C*H*W is not a multiple of 128.
        x2 = jnp.pad(x2, ((0, 0), (0, e_pad - e)), mode="edge")
    r_tot = e_pad // _LANE
    x3 = x2.reshape((n, r_tot, _LANE))

    # ~4 MiB chunks (sized on the wider of in/out dtype): per-step DMA stays well
    # above the ~0.35 us grid-step overhead even at v7x's ~3.2 TB/s.
    r_chunk = max(8, (_CHUNK_TARGET_BYTES // (_LANE * max(in_item, out_item))) // 8 * 8)
    r_chunk = min(r_chunk, r_tot)
    n_chunks = _cdiv(r_tot, r_chunk)

    # v7x megacore: with a single image the 'parallel' axis would have extent 1
    # and one TensorCore would idle for the whole reduction -> split the chunk
    # axis 2-way and combine the two partial (min, max) pairs in the wrapper.
    n_split = 2 if (n == 1 and n_chunks >= 4 and n_chunks % 2 == 0) else 1
    chunks_per_split = n_chunks // n_split

    minmax_kernel = _make_minmax_kernel(r_tot, r_chunk, chunks_per_split, n_split)

    def p1_in_map(i, k):
        return (i // n_split, (i % n_split) * chunks_per_split + k, 0)

    mn_out, mx_out = pl.pallas_call(
        minmax_kernel,
        out_shape=(jax.ShapeDtypeStruct((n * n_split, 8, _LANE), jnp.float32),
                   jax.ShapeDtypeStruct((n * n_split, 8, _LANE), jnp.float32)),
        grid_spec=pltpu.PrefetchScalarGridSpec(
            num_scalar_prefetch=0,
            grid=(n * n_split, chunks_per_split),
            in_specs=[pl.BlockSpec((1, r_chunk, _LANE), p1_in_map)],
            out_specs=[pl.BlockSpec((1, 8, _LANE), lambda i, k: (i, 0, 0)),
                       pl.BlockSpec((1, 8, _LANE), lambda i, k: (i, 0, 0))],
            scratch_shapes=[pltpu.VMEM((1, 8, _LANE), jnp.float32),
                            pltpu.VMEM((1, 8, _LANE), jnp.float32)],
        ),
        compiler_params=pltpu.CompilerParams(
            dimension_semantics=("parallel", "arbitrary"),
            vmem_limit_bytes=vmem_limit,
        ),
    )(x3)

    # Combine per-split partials; exact scalar math on n values (negligible).
    mn_vals = mn_out[:, 0, 0].reshape((n, n_split)).min(axis=1)
    mx_vals = mx_out[:, 0, 0].reshape((n, n_split)).max(axis=1)
    inv_vals = 1.0 / (mx_vals - mn_vals + EPS)

    out3 = pl.pallas_call(
        _rescale_kernel,
        out_shape=jax.ShapeDtypeStruct((n, r_tot, _LANE), out_dtype),
        grid_spec=pltpu.PrefetchScalarGridSpec(
            num_scalar_prefetch=2,
            grid=(n, n_chunks),
            in_specs=[pl.BlockSpec((1, r_chunk, _LANE),
                                   lambda i, k, mn_s, inv_s: (i, k, 0))],
            out_specs=pl.BlockSpec((1, r_chunk, _LANE),
                                   lambda i, k, mn_s, inv_s: (i, k, 0)),
        ),
        compiler_params=pltpu.CompilerParams(
            dimension_semantics=("parallel", "parallel"),
            vmem_limit_bytes=vmem_limit,
        ),
    )(mn_vals, inv_vals, x3)

    out2 = out3.reshape((n, e_pad))
    if e_pad != e:
        out2 = out2[:, :e]
    return out2.reshape(x.shape)


# ---------------------------------------------------------------------------
# Public wrapper (forward pass of the `Normalize` module).
# ---------------------------------------------------------------------------
def normalize(x: jax.Array, *, out_dtype=None, force_two_pass: bool = False) -> jax.Array:
    """Per-image min-max normalization of an NCHW tensor to [0, 1]."""
    if x.ndim < 2:
        raise ValueError("normalize expects a batched image tensor (N, ...)")
    n = x.shape[0]
    e = 1
    for d in x.shape[1:]:
        e *= int(d)

    if out_dtype is None:
        # Integer images get a float result; floating inputs keep their dtype.
        out_dtype = x.dtype if jnp.issubdtype(x.dtype, jnp.floating) else jnp.float32
    out_dtype = jnp.dtype(out_dtype)

    # Generation-aware budgets: 96 MiB limit on v5e/v6e (128 MiB VMEM),
    # 48 MiB on v7x (64 MiB VMEM); block-size budget leaves pipeline headroom.
    vmem_cap = _vmem_capacity_bytes()
    vmem_limit = int(vmem_cap * 3 // 4)
    vmem_budget = int(vmem_limit * 7 // 10)

    in_item = jnp.dtype(x.dtype).itemsize
    out_item = out_dtype.itemsize
    f32_tmp = 0 if jnp.dtype(x.dtype) == jnp.dtype(jnp.float32) else 4
    per_image = e * (2 * (in_item + out_item) + f32_tmp)   # true single-pass residency

    if (not force_two_pass) and per_image <= vmem_budget:
        return _normalize_single_pass(x, n, e, out_dtype, vmem_budget, vmem_limit)
    return _normalize_two_pass(x, n, e, out_dtype, vmem_limit)


if __name__ == "__main__":
    key = jax.random.PRNGKey(0)
    # Small NCHW image batch: batch=2, channels=4, spatial=16x16
    x = jax.random.normal(key, (2, 4, 16, 16), dtype=jnp.float32) * 37.0 + 5.0

    # Pure-JAX reference.
    mn = x.min(axis=(1, 2, 3), keepdims=True)
    mx = x.max(axis=(1, 2, 3), keepdims=True)
    ref = (x - mn) / (mx - mn + EPS)

    # Path A (single pass, whole image(s) per block).
    out = jax.block_until_ready(normalize(x))
    assert out.shape == x.shape and out.dtype == x.dtype
    assert jnp.allclose(out, ref, atol=1e-5, rtol=1e-5), float(jnp.max(jnp.abs(out - ref)))

    # Path B (two-pass tiled fallback for images too large for VMEM), forced.
    out_b = jax.block_until_ready(normalize(x, force_two_pass=True))
    assert out_b.shape == x.shape
    assert jnp.allclose(out_b, ref, atol=1e-5, rtol=1e-5), float(jnp.max(jnp.abs(out_b - ref)))

    print("KERNEL_OK")
</pallas_src>

<mosaic_0001>
module attributes {stable_mosaic.version = 11 : i64} {
  func.func @_single_pass_kernel(%arg0: i32, %arg1: memref<1x8x128xf32, #tpu.memory_space<vmem>>, %arg2: memref<1x8x128xf32, #tpu.memory_space<vmem>>) attributes {dimension_semantics = [#tpu.dimension_semantics<parallel>], iteration_bounds = array<i64: 2>, scalar_prefetch = 0 : i64, scratch_operands = 0 : i64, tpu.core_type = #tpu.core_type<tc>, window_params = [{transform_indices = @transform_0, window_bounds = array<i64: 1, 8, 128>}, {transform_indices = @transform_1, window_bounds = array<i64: 1, 8, 128>}]} {
    %c0 = arith.constant 0 : index
    %c0_0 = arith.constant 0 : index
    %c0_1 = arith.constant 0 : index
    %0 = vector.load %arg1[%c0, %c0_0, %c0_1] : memref<1x8x128xf32, #tpu.memory_space<vmem>>, vector<1x8x128xf32>
    %cst = arith.constant dense<0x7F800000> : vector<1x8xf32>
    %1 = vector.multi_reduction <minimumf>, %0, %cst [2] : vector<1x8x128xf32> to vector<1x8xf32>
    %2 = vector.shape_cast %1 : vector<1x8xf32> to vector<1x8x1xf32>
    %cst_2 = arith.constant dense<0xFF800000> : vector<1x8xf32>
    %3 = vector.multi_reduction <maximumf>, %0, %cst_2 [2] : vector<1x8x128xf32> to vector<1x8xf32>
    %4 = vector.shape_cast %3 : vector<1x8xf32> to vector<1x8x1xf32>
    %cst_3 = arith.constant dense<0x7F800000> : vector<1x1xf32>
    %5 = vector.multi_reduction <minimumf>, %2, %cst_3 [1] : vector<1x8x1xf32> to vector<1x1xf32>
    %6 = vector.shape_cast %5 : vector<1x1xf32> to vector<1x1x1xf32>
    %cst_4 = arith.constant dense<0xFF800000> : vector<1x1xf32>
    %7 = vector.multi_reduction <maximumf>, %4, %cst_4 [1] : vector<1x8x1xf32> to vector<1x1xf32>
    %8 = vector.shape_cast %7 : vector<1x1xf32> to vector<1x1x1xf32>
    %9 = arith.subf %8, %6 : vector<1x1x1xf32>
    %cst_5 = arith.constant 9.99999993E-9 : f32
    %10 = vector.broadcast %cst_5 : f32 to vector<1x1x1xf32>
    %11 = arith.addf %9, %10 : vector<1x1x1xf32>
    %cst_6 = arith.constant 1.000000e+00 : f32
    %12 = vector.broadcast %cst_6 : f32 to vector<1x1x1xf32>
    %13 = arith.divf %12, %11 : vector<1x1x1xf32>
    %14 = vector.broadcast %6 : vector<1x1x1xf32> to vector<1x8x128xf32>
    %15 = arith.subf %0, %14 : vector<1x8x128xf32>
    %16 = vector.broadcast %13 : vector<1x1x1xf32> to vector<1x8x128xf32>
    %17 = arith.mulf %15, %16 : vector<1x8x128xf32>
    %c0_7 = arith.constant 0 : index
    %c0_8 = arith.constant 0 : index
    %c0_9 = arith.constant 0 : index
    %18 = vector.load %arg2[%c0_7, %c0_8, %c0_9] : memref<1x8x128xf32, #tpu.memory_space<vmem>>, vector<1x8x128xf32>
    tpu.vector_store %arg2[%c0_7, %c0_8, %c0_9], %17 {strides = array<i32>} : memref<1x8x128xf32, #tpu.memory_space<vmem>>, vector<1x8x128xf32>,
    return
  }
  func.func @transform_0(%arg0: i32) -> (i32, i32, i32) {
    %c0_i32 = arith.constant 0 : i32
    %c0_i32_0 = arith.constant 0 : i32
    %c0_i32_1 = arith.constant 0 : i32
    return %arg0, %c0_i32, %c0_i32_0 : i32, i32, i32
  }
  func.func @transform_1(%arg0: i32) -> (i32, i32, i32) {
    %c0_i32 = arith.constant 0 : i32
    %c0_i32_0 = arith.constant 0 : i32
    %c0_i32_1 = arith.constant 0 : i32
    return %arg0, %c0_i32, %c0_i32_0 : i32, i32, i32
  }
}

</mosaic_0001>

<llo_original>
// kernel: tpu_custom_call.1
$region0: #{tpu_custom_call.1}
  #allocation0 [shape = 'u32[]', space=smem, size = 0x4, offset = 0x4, fixed_abs, tag = 'smem constant byte address 0x4 - core index']
  #allocation1 [shape = 'u32[72,128]{1,0:T(1,128)}', space=vmem, size = 0x9000, scoped, tag = 'internal scratch']
  %s0 = inlined_call_operand.hbm [shape: f32[2,8,128], index: 0, kind: input, shape index: {}]
  %s1 = inlined_call_operand.hbm [shape: f32[2,8,128], index: 1, kind: output, shape index: {}]
  %s2 = sld [smem:[#allocation0]]
  $region41: #{tpu_custom_call.1} parent=0
    _
  %s4 = ssub.s32 1, %s2
  %s5 = scalar_select 0, %s4, %s2
  $region1: #{tpu_custom_call.1} parent=0
    #allocation2 [shape = 'u8[8192]{0}', space=vmem, size = 0x2000, scoped, tag = 'input window, operand 0']
    #allocation3 [shape = 's32[2]{0}', space=sflag, size = 0x8, scoped, tag = 'scoped memory for tpu_custom_call.1']
    #allocation4 [shape = 's32[2]{0}', space=sflag, size = 0x8, scoped, tag = 'scoped memory for tpu_custom_call.1']
    #allocation5 [shape = 'u8[8192]{0}', space=vmem, size = 0x2000, scoped, tag = 'output window, operand 0']
    %6 = vsyncpa [#allocation3], 0
    %s7 = scalar_lea.sflag [#allocation3], 1
    %8 = vsyncpa %s7, 0
    %9 = vsyncpa [#allocation4], 0
    %s10 = scalar_lea.sflag [#allocation4], 1
    %11 = vsyncpa %s10, 0
    loop: start=0, step=1, limit=4
    $region2: #{tpu_custom_call.1} parent=1 // loop_pre_header
      _
    $region3: #{tpu_custom_call.1} parent=1 // loop_header
      %s13 = sphi 0, %s17
      %p14 = scmp.ge.s32.totalorder %s13, 4
      %s23 = sphi 0, %s25
      %s26 = sphi 0, %s23
      %s27 = sphi 0, %s26
      %s43 = sphi 0, %s27
      %s49 = sphi 0, %s51
      %s52 = sphi 0, %s49
      %s53 = sphi 0, %s52
      %s69 = sphi 0, %s53
    $region4: #{tpu_custom_call.1} parent=1 // loop_header_branch
      %16 = sbr.rel (%p14) target = $region8
    $region5: #{tpu_custom_call.1} parent=1 // loop_body
      %s18 = ssub.s32 %s13, 1
      %s19 = ssub.s32 %s13, 2
      %s20 = sadd.s32 %s13, 1
      %s21 = ssub.s32 %s13, %s20
      %p22 = scmp.eq.s32.totalorder %s21, 0
      %s24 = sadd.s32 %s23, 1
      %s25 = scalar_select %p22, %s23, %s24
      %p28 = pneg %p22
      %p29 = scmp.eq.s32.totalorder %s13, 1
      %p30 = por %p28, %p29
      %p31 = scmp.ne.s32.totalorder %s23, %s26
      %p32 = scmp.eq.s32.totalorder %s13, 0
      %p33 = por %p31, %p32
      %p34 = scmp.ne.s32.totalorder %s23, %s26
      %p35 = scmp.eq.s32.totalorder %s18, 1
      %p36 = por %p34, %p35
      %p37 = scmp.ne.s32.totalorder %s26, %s27
      %p38 = scmp.eq.s32.totalorder %s18, 0
      %p39 = por %p37, %p38
      %p40 = scmp.ne.s32.totalorder %s26, %s27
      %p41 = scmp.eq.s32.totalorder %s19, 1
      %p42 = por %p40, %p41
      %p44 = scmp.ne.s32.totalorder %s27, %s43
      %p45 = scmp.eq.s32.totalorder %s19, 0
      %p46 = por %p44, %p45
      %s47 = ssub.s32 %s13, %s20
      %p48 = scmp.eq.s32.totalorder %s47, 0
      %s50 = sadd.s32 %s49, 1
      %s51 = scalar_select %p48, %s49, %s50
      %p54 = pneg %p48
      %p55 = scmp.eq.s32.totalorder %s13, 1
      %p56 = por %p54, %p55
      %p57 = scmp.ne.s32.totalorder %s49, %s52
      %p58 = scmp.eq.s32.totalorder %s13, 0
      %p59 = por %p57, %p58
      %p60 = scmp.ne.s32.totalorder %s49, %s52
      %p61 = scmp.eq.s32.totalorder %s18, 1
      %p62 = por %p60, %p61
      %p63 = scmp.ne.s32.totalorder %s52, %s53
      %p64 = scmp.eq.s32.totalorder %s18, 0
      %p65 = por %p63, %p64
      %p66 = scmp.ne.s32.totalorder %s52, %s53
      %p67 = scmp.eq.s32.totalorder %s19, 1
      %p68 = por %p66, %p67
      %p70 = scmp.ne.s32.totalorder %s53, %s69
      %p71 = scmp.eq.s32.totalorder %s19, 0
      %p72 = por %p70, %p71
      %p73 = scmp.le.s32.totalorder 1, %s13
      %p74 = scmp.lt.s32.totalorder %s13, 3
      %p75 = pnand %p73, %p74
      %p76 = pneg %p75
      // Predicated region
      $region9: #{tpu_custom_call.1} parent=5 // pred_check
        _
      $region10: #{tpu_custom_call.1} parent=5 // pred_check_branch
        %78 = sbr.rel (%p75) target = $region12
      $region11: #{tpu_custom_call.1} parent=5 // pred_region
        %s79 = ssub.s32 %s13, 1
      $region12: #{tpu_custom_call.1} parent=5 // pred_fallthru
        _
      %p80 = scmp.lt.s32.totalorder %s13, 2
      // Predicated region
      $region13: #{tpu_custom_call.1} parent=5 // pred_check
        %p81 = pneg %p80
      $region14: #{tpu_custom_call.1} parent=5 // pred_check_branch
        %83 = sbr.rel (%p81) target = $region16
      $region15: #{tpu_custom_call.1} parent=5 // pred_region
        // Predicated region
        $region17: #{tpu_custom_call.1} parent=15 // pred_check
          %p84 = pneg %p33
        $region18: #{tpu_custom_call.1} parent=15 // pred_check_branch
          %86 = sbr.rel (%p84) target = $region20
        $region19: #{tpu_custom_call.1} parent=15 // pred_region
          %s87 = sand.u32 %s23, 1
          %s88 = scalar_lea.sflag [#allocation3], %s87
          %s89 = sand.u32 %s23, 1
          %s90 = smul.addr %s89, 8
          %s91 = scalar_lea.vmem [#allocation2], %s90
          %93 = vsyncadd %s88, 0
          %s94 = smul.addr %s13, 8
          %s95 = scalar_lea.hbm %s0, %s94
          %s97 = sshll.u32 %s95, 4
          %s98 = int_to_ptr.hbm [resolvable:$true] %s97
          %s99 = sshll.u32 %s91, 4
          %s100 = int_to_ptr.vmem [resolvable:$true] %s99
          %102 = dma.hbm_to_vmem [thread:$0]  %s98, 128, %s100, %s88
        $region20: #{tpu_custom_call.1} parent=15 // pred_fallthru
          _
      $region16: #{tpu_custom_call.1} parent=5 // pred_fallthru
        _
      %p103 = scmp.le.s32.totalorder 1, %s13
      %p104 = scmp.lt.s32.totalorder %s13, 3
      %p105 = pnand %p103, %p104
      %p106 = pneg %p105
      // Predicated region
      $region21: #{tpu_custom_call.1} parent=5 // pred_check
        _
      $region22: #{tpu_custom_call.1} parent=5 // pred_check_branch
        %108 = sbr.rel (%p105) target = $region24
      $region23: #{tpu_custom_call.1} parent=5 // pred_region
        %s109 = ssub.s32 %s13, 1
        %s110 = sand.u32 %s26, 1
        %s111 = scalar_lea.sflag [#allocation3], %s110
        %s112 = sand.u32 %s26, 1
        %s113 = smul.addr %s112, 8
        %s114 = scalar_lea.vmem [#allocation2], %s113
        // Predicated region
        $region25: #{tpu_custom_call.1} parent=23 // pred_check
          %p115 = pneg %p39
        $region26: #{tpu_custom_call.1} parent=23 // pred_check_branch
          %117 = sbr.rel (%p115) target = $region28
        $region27: #{tpu_custom_call.1} parent=23 // pred_region
          %119 = dma.done %s111, 128
        $region28: #{tpu_custom_call.1} parent=23 // pred_fallthru
          _
        %s120 = sand.u32 %s26, 1
        %s121 = scalar_lea.sflag [#allocation3], %s120
        %s122 = sand.u32 %s26, 1
        %s123 = smul.addr %s122, 8
        %s124 = scalar_lea.vmem [#allocation2], %s123
        %p125 = pneg %p39
        %p126 = pneg %p36
        %p127 = pneg %p65
        %p128 = pneg %p62
        %s129 = sand.u32 %s52, 1
        %s130 = scalar_lea.sflag [#allocation4], %s129
        %s131 = sand.u32 %s52, 1
        %s132 = smul.addr %s131, 8
        %s133 = scalar_lea.vmem [#allocation5], %s132
        %v134 = vld [vmem:[%s114] sm:$0xff]
        %135 = vmin.xlane.f32.xlu0 %v134
        %v136 = vpop.xlane.xlu0 %135
        %137 = vmax.xlane.f32.xlu0 %v134
        %v138 = vpop.xlane.xlu0 %137
        %v139 = vrot.slane %v136, 4
        %v140 = vmin.f32 %v136, %v139
        %v141 = vrot.slane %v140, 2
        %v142 = vmin.f32 %v140, %v141
        %v143 = vrot.slane %v142, 1
        %v144 = vmin.f32 %v142, %v143
        %v145 = vrot.slane %v138, 4
        %v146 = vmax.f32 %v138, %v145
        %v147 = vrot.slane %v146, 2
        %v148 = vmax.f32 %v146, %v147
        %v149 = vrot.slane %v148, 1
        %v150 = vmax.f32 %v148, %v149
        %v151 = vsub.f32 %v150, %v144
        %v152 = vadd.f32 %v151, 1e-08
        %v153 = vrcp.pop %v152
        %v154 = vmul.f32 %v152, %v153
        %v155 = vsub.f32 1.0, %v154
        %v156 = vmul.f32 %v153, %v155
        %v157 = vadd.f32 %v153, %v156
        %vm158 = vweird.f32 %v152
        %vm159 = vweird.f32 %v153
        %vm160 = vmor %vm158, %vm159
        %v161 = vsel %vm160, %v153, %v157
        %v162 = vand.u32 2147483647, %v152
        %vm163 = vcmp.eq.f32.partialorder %v162, 8.507059e+37
        %v164 = vand.u32 %v152, 2147483648
        %v165 = vor.u32 1.1754944e-38, %v164
        %v166 = vsel %vm163, %v165, %v161
        %v167 = vmul.f32 1.0, %v166
        %v168 = vsub.f32 %v134, %v144
        %v169 = vmul.f32 %v168, %v167
        %170 = vst [vmem:[%s133] sm:$0xff] %v169
        %s171 = sand.u32 %s52, 1
        %s172 = scalar_lea.sflag [#allocation4], %s171
        %s173 = sand.u32 %s52, 1
        %s174 = smul.addr %s173, 8
        %s175 = scalar_lea.vmem [#allocation5], %s174
        // Predicated region
        $region29: #{tpu_custom_call.1} parent=23 // pred_check
          %p176 = pneg %p62
        $region30: #{tpu_custom_call.1} parent=23 // pred_check_branch
          %178 = sbr.rel (%p176) target = $region32
        $region31: #{tpu_custom_call.1} parent=23 // pred_region
          %180 = vsyncadd %s172, 0
          %s181 = smul.addr %s18, 8
          %s182 = scalar_lea.hbm %s1, %s181
          %s184 = sshll.u32 %s175, 4
          %s185 = int_to_ptr.vmem [resolvable:$true] %s184
          %s186 = sshll.u32 %s182, 4
          %s187 = int_to_ptr.hbm [resolvable:$true] %s186
          %189 = dma.vmem_to_hbm [thread:$0]  %s185, 128, %s187, %s172
        $region32: #{tpu_custom_call.1} parent=23 // pred_fallthru
          _
      $region24: #{tpu_custom_call.1} parent=5 // pred_fallthru
        _
      %p190 = scmp.le.s32.totalorder 2, %s13
      // Predicated region
      $region33: #{tpu_custom_call.1} parent=5 // pred_check
        %p191 = pneg %p190
      $region34: #{tpu_custom_call.1} parent=5 // pred_check_branch
        %193 = sbr.rel (%p191) target = $region36
      $region35: #{tpu_custom_call.1} parent=5 // pred_region
        %s194 = ssub.s32 %s13, 2
        // Predicated region
        $region37: #{tpu_custom_call.1} parent=35 // pred_check
          %p195 = pneg %p68
        $region38: #{tpu_custom_call.1} parent=35 // pred_check_branch
          %197 = sbr.rel (%p195) target = $region40
        $region39: #{tpu_custom_call.1} parent=35 // pred_region
          %s198 = sand.u32 %s53, 1
          %s199 = scalar_lea.sflag [#allocation4], %s198
          %s200 = sand.u32 %s53, 1
          %s201 = smul.addr %s200, 8
          %s202 = scalar_lea.vmem [#allocation5], %s201
          %204 = dma.done %s199, 128
        $region40: #{tpu_custom_call.1} parent=35 // pred_fallthru
          _
      $region36: #{tpu_custom_call.1} parent=5 // pred_fallthru
        _
    $region6: #{tpu_custom_call.1} parent=1 // loop_footer
      %s17 = sadd.s32 1, %s13
    $region7: #{tpu_custom_call.1} parent=1 // loop_footer_branch
      %12 = sbr.rel target = $region3
    $region8: #{tpu_custom_call.1} parent=1 // loop_exit
      _
    %205 = vsyncpa [#allocation3], 1
    %s206 = scalar_lea.sflag [#allocation3], 1
    %207 = vsyncpa %s206, 1
    %208 = vsyncpa [#allocation4], 1
    %s209 = scalar_lea.sflag [#allocation4], 1
    %210 = vsyncpa %s209, 1

</llo_original>
